<compile_context>
chip_gen: v7x
topology: tpu7x:2x2x1
jax: 0.10.0
libtpu: 0.0.40
codegen_flags: <defaults>
</compile_context>

<pallas_src>
import functools

import jax
import jax.numpy as jnp
from jax import lax
from jax.experimental import pallas as pl
from jax.experimental.pallas import tpu as pltpu


def _per_row_focal_loss(x, t_col, *, gamma, tile_n, c):
    """(1-pt)^gamma * ce for a (tile_n, C) logits tile; returns (tile_n, 1) f32.

    `x` stays in its native dtype for the one-hot gather and the row max
    (bit-exact; the one-hot sum has a single non-zero so it is exact in any
    dtype).  Only the exp/log path is computed in f32.  `alpha` is folded in
    by the caller (finalize-time scale for reduced outputs).
    """
    class_ids = lax.broadcasted_iota(jnp.int32, (tile_n, c), 1)       # (tile_n, C)
    onehot = class_ids == t_col                                       # (tile_n, C)
    tgt = jnp.sum(jnp.where(onehot, x, jnp.zeros_like(x)),
                  axis=-1, keepdims=True).astype(jnp.float32)         # (tile_n, 1)
    m = jnp.max(x, axis=-1, keepdims=True).astype(jnp.float32)        # (tile_n, 1)
    xf = x.astype(jnp.float32)
    lse = m + jnp.log(jnp.sum(jnp.exp(xf - m), axis=-1, keepdims=True))
    ce = lse - tgt                                                    # (tile_n, 1)
    pt = jnp.exp(-ce)
    one_minus_pt = jnp.maximum(1.0 - pt, 0.0)                         # clamp drift
    if float(gamma) == int(gamma) and int(gamma) >= 0:
        focal = lax.integer_pow(one_minus_pt, int(gamma))             # VPU muls only
    else:
        focal = one_minus_pt ** jnp.float32(gamma)
    return focal * ce


def _reduced_kernel(logits_ref, targets_ref, out_ref, acc_ref, *,
                    gamma, tile_n, c, n, num_blocks, steps):
    """'mean'/'sum' path: per-split SMEM accumulator, finalize once per split."""
    s = pl.program_id(0)          # split (parallel -> one per TensorCore on v7x)
    i = pl.program_id(1)          # step within this split (reduction axis)

    @pl.when(i == 0)
    def _():
        acc_ref[0] = jnp.float32(0.0)

    t_col = jnp.transpose(targets_ref[...])                  # (1,tile) -> (tile,1)
    loss = _per_row_focal_loss(logits_ref[...], t_col,
                               gamma=gamma, tile_n=tile_n, c=c)
    blk = s * steps + i                                       # logical block index

    @pl.when(blk < num_blocks - 1)                            # full tiles: no mask
    def _():
        acc_ref[0] += jnp.sum(loss)

    @pl.when(blk >= num_blocks - 1)                           # last / clamped tiles
    def _():
        row_ids = blk * tile_n + lax.broadcasted_iota(jnp.int32, (tile_n, 1), 0)
        valid = (row_ids < n) & (blk < num_blocks)
        acc_ref[0] += jnp.sum(jnp.where(valid, loss, 0.0))

    @pl.when(i == steps - 1)
    def _():
        # One unmasked (8,128) store per split; partials are combined and
        # scaled (alpha, 1/N) in the wrapper.
        out_ref[...] = jnp.full((1, 8, 128), acc_ref[0], dtype=jnp.float32)


def _per_sample_kernel(logits_ref, targets_ref, out_ref, *, alpha, gamma, tile_n, c):
    """reduction='none': lane-dense (1, tile_n) per-sample losses."""
    t_col = jnp.transpose(targets_ref[...])                   # (1,tile) -> (tile,1)
    loss = _per_row_focal_loss(logits_ref[...], t_col,
                               gamma=gamma, tile_n=tile_n, c=c)
    out_ref[...] = jnp.float32(alpha) * jnp.transpose(loss)   # (1, tile), lane-dense


def _pick_tile_rows(n, c, itemsize, override=None):
    """Rows per block: <=4 MiB native logits block, <=~20 MiB total working set."""
    if override is not None:
        tile = int(override)
    else:
        ws_budget = 20 * 1024 * 1024     # 2x native block + ~2x f32 intermediates
        blk_budget = 4 * 1024 * 1024     # native logits block (DMA granularity)
        tile = min(ws_budget // max(1, c * (2 * itemsize + 8)),
                   blk_budget // max(1, c * itemsize))
    if tile >= n:
        return n                          # single full-extent block (no 8/128 rule)
    return max(128, (tile // 128) * 128)  # multi-block: lane-dense 128 alignment


def focal_loss(logits, targets, *, alpha=1.0, gamma=2.0, reduction="mean",
               tile_rows=None):
    """Pallas TPU implementation of FocalLoss.forward.

    logits:  (N, C) float array (kept in its native dtype across HBM)
    targets: (N,)   int array of class indices in [0, C)
    tile_rows: optional override of the rows-per-block tile (testing/tuning).
    """
    n, c = logits.shape
    targets_row = targets.astype(jnp.int32).reshape(1, n)      # lane-dense targets
    itemsize = jnp.dtype(logits.dtype).itemsize
    tile_n = _pick_tile_rows(n, c, itemsize, tile_rows)
    num_blocks = -(-n // tile_n)

    cost = pl.CostEstimate(
        flops=int(8 * n * c),
        transcendentals=int(n * (c + 2)),
        bytes_accessed=int(n * c * itemsize + n * 4 + 4),
    )
    vmem_limit = 32 * 1024 * 1024

    if reduction in ("mean", "sum"):
        num_splits = 2 if num_blocks >= 2 else 1     # one split per TC on v7x
        steps = -(-num_blocks // num_splits)

        def logits_map(s, i):
            return (jnp.minimum(s * steps + i, num_blocks - 1), 0)

        def targets_map(s, i):
            return (0, jnp.minimum(s * steps + i, num_blocks - 1))

        kernel = functools.partial(
            _reduced_kernel, gamma=float(gamma), tile_n=tile_n, c=c, n=n,
            num_blocks=num_blocks, steps=steps)
        partials = pl.pallas_call(
            kernel,
            out_shape=jax.ShapeDtypeStruct((num_splits, 8, 128), jnp.float32),
            grid=(num_splits, steps),
            in_specs=[pl.BlockSpec((tile_n, c), logits_map),
                      pl.BlockSpec((1, tile_n), targets_map)],
            out_specs=pl.BlockSpec((1, 8, 128), lambda s, i: (s, 0, 0)),
            scratch_shapes=[pltpu.SMEM((1,), jnp.float32)],
            compiler_params=pltpu.CompilerParams(
                dimension_semantics=("parallel", "arbitrary"),
                vmem_limit_bytes=vmem_limit),
            cost_estimate=cost,
        )(logits, targets_row)
        total = jnp.sum(partials[:, 0, 0])
        scale = float(alpha) / n if reduction == "mean" else float(alpha)
        return total * jnp.float32(scale)

    if reduction == "none":
        kernel = functools.partial(
            _per_sample_kernel, alpha=float(alpha), gamma=float(gamma),
            tile_n=tile_n, c=c)
        out = pl.pallas_call(
            kernel,
            out_shape=jax.ShapeDtypeStruct((1, n), jnp.float32),
            grid=(num_blocks,),
            in_specs=[pl.BlockSpec((tile_n, c), lambda i: (i, 0)),
                      pl.BlockSpec((1, tile_n), lambda i: (0, i))],
            out_specs=pl.BlockSpec((1, tile_n), lambda i: (0, i)),
            compiler_params=pltpu.CompilerParams(
                dimension_semantics=("parallel",),
                vmem_limit_bytes=vmem_limit),
            cost_estimate=cost,
        )(logits, targets_row)
        return out[0, :]

    raise ValueError(f"unknown reduction: {reduction!r}")


def _focal_loss_ref(logits, targets, alpha=1.0, gamma=2.0, reduction="mean"):
    """Pure-JAX reference matching PyTorch semantics."""
    x = logits.astype(jnp.float32)
    lse = jax.scipy.special.logsumexp(x, axis=-1)
    tgt = jnp.take_along_axis(x, targets[:, None].astype(jnp.int32), axis=-1)[:, 0]
    ce = lse - tgt
    pt = jnp.exp(-ce)
    f = alpha * (1.0 - pt) ** gamma * ce
    if reduction == "mean":
        return jnp.mean(f)
    if reduction == "sum":
        return jnp.sum(f)
    return f


if __name__ == "__main__":
    key = jax.random.PRNGKey(0)
    k1, k2, k3, k4, k5, k6 = jax.random.split(key, 6)

    # Small shapes consistent with the training script: batch x num_classes.
    N, C = 8, 32
    logits = jax.random.normal(k1, (N, C), dtype=jnp.float32)
    targets = jax.random.randint(k2, (N,), 0, C, dtype=jnp.int32)

    out = jax.block_until_ready(focal_loss(logits, targets, alpha=1.0, gamma=2.0))
    ref = _focal_loss_ref(logits, targets, reduction="mean")
    assert jnp.allclose(out, ref, rtol=1e-5, atol=1e-5), (out, ref)

    out_sum = jax.block_until_ready(focal_loss(logits, targets, reduction="sum"))
    ref_sum = _focal_loss_ref(logits, targets, reduction="sum")
    assert jnp.allclose(out_sum, ref_sum, rtol=1e-5, atol=1e-5), (out_sum, ref_sum)

    out_none = jax.block_until_ready(focal_loss(logits, targets, reduction="none"))
    ref_none = _focal_loss_ref(logits, targets, reduction="none")
    assert jnp.allclose(out_none, ref_none, rtol=1e-5, atol=1e-5)

    # N not a multiple of 8 (single full-extent block) + bf16 HBM storage.
    N2 = 13
    logits_bf16 = jax.random.normal(k3, (N2, C), dtype=jnp.bfloat16)
    targets2 = jax.random.randint(k4, (N2,), 0, C, dtype=jnp.int32)
    out2 = jax.block_until_ready(focal_loss(logits_bf16, targets2))
    ref2 = _focal_loss_ref(logits_bf16, targets2, reduction="mean")
    assert jnp.allclose(out2, ref2, rtol=1e-4, atol=1e-4), (out2, ref2)

    # Multi-block path (forced small tile): exercises the 2-way TensorCore
    # split of the reduction, index-map clamping, last-tile masking and the
    # partial lane-dense output block.
    N3, C3 = 300, 16
    logits3 = jax.random.normal(k5, (N3, C3), dtype=jnp.float32)
    targets3 = jax.random.randint(k6, (N3,), 0, C3, dtype=jnp.int32)
    for red in ("mean", "sum", "none"):
        got = jax.block_until_ready(
            focal_loss(logits3, targets3, alpha=0.25, gamma=2.0,
                       reduction=red, tile_rows=128))
        want = _focal_loss_ref(logits3, targets3, alpha=0.25, gamma=2.0,
                               reduction=red)
        assert jnp.allclose(got, want, rtol=1e-5, atol=1e-5), (red, got, want)

    print("KERNEL_OK")
</pallas_src>

<mosaic_0001>
module attributes {stable_mosaic.version = 11 : i64} {
  func.func @_reduced_kernel(%arg0: i32, %arg1: i32, %arg2: memref<8x32xf32, #tpu.memory_space<vmem>>, %arg3: memref<1x8xi32, #tpu.memory_space<vmem>>, %arg4: memref<1x8x128xf32, #tpu.memory_space<vmem>>, %arg5: memref<1xf32, #tpu.memory_space<smem>>) attributes {dimension_semantics = [#tpu.dimension_semantics<parallel>, #tpu.dimension_semantics<arbitrary>], iteration_bounds = array<i64: 1, 1>, scalar_prefetch = 0 : i64, scratch_operands = 1 : i64, tpu.core_type = #tpu.core_type<tc>, window_params = [{transform_indices = @transform_0, window_bounds = array<i64: 8, 32>}, {transform_indices = @transform_1, window_bounds = array<i64: 1, 8>}, {transform_indices = @transform_2, window_bounds = array<i64: 1, 8, 128>}]} {
    %c0_i32 = arith.constant 0 : i32
    %0 = arith.cmpi eq, %arg1, %c0_i32 : i32
    %1 = arith.extui %0 : i1 to i32
    %c0_i32_0 = arith.constant 0 : i32
    %2 = arith.cmpi ne, %1, %c0_i32_0 : i32
    scf.if %2 {
      %cst_16 = arith.constant 0.000000e+00 : f32
      %c0_17 = arith.constant 0 : index
      %43 = memref.load %arg5[%c0_17] : memref<1xf32, #tpu.memory_space<smem>>
      memref.store %cst_16, %arg5[%c0_17] : memref<1xf32, #tpu.memory_space<smem>>
    } else {
    }
    %c0 = arith.constant 0 : index
    %c0_1 = arith.constant 0 : index
    %3 = vector.load %arg3[%c0, %c0_1] : memref<1x8xi32, #tpu.memory_space<vmem>>, vector<1x8xi32>
    %4 = tpu.transpose %3, [1, 0] : vector<1x8xi32> -> vector<8x1xi32>
    %c0_2 = arith.constant 0 : index
    %c0_3 = arith.constant 0 : index
    %5 = vector.load %arg2[%c0_2, %c0_3] : memref<8x32xf32, #tpu.memory_space<vmem>>, vector<8x32xf32>
    %6 = tpu.iota {dimensions = array<i32: 1>} : vector<8x32xi32>
    %7 = vector.broadcast %4 : vector<8x1xi32> to vector<8x32xi32>
    %8 = arith.cmpi eq, %6, %7 : vector<8x32xi32>
    %cst = arith.constant 0.000000e+00 : f32
    %9 = vector.broadcast %cst : f32 to vector<8x32xf32>
    %10 = arith.select %8, %5, %9 : vector<8x32xi1>, vector<8x32xf32>
    %cst_4 = arith.constant dense<0.000000e+00> : vector<8xf32>
    %11 = vector.multi_reduction <add>, %10, %cst_4 [1] : vector<8x32xf32> to vector<8xf32>
    %12 = vector.shape_cast %11 : vector<8xf32> to vector<8x1xf32>
    %cst_5 = arith.constant dense<0xFF800000> : vector<8xf32>
    %13 = vector.multi_reduction <maximumf>, %5, %cst_5 [1] : vector<8x32xf32> to vector<8xf32>
    %14 = vector.shape_cast %13 : vector<8xf32> to vector<8x1xf32>
    %15 = vector.broadcast %14 : vector<8x1xf32> to vector<8x32xf32>
    %16 = arith.subf %5, %15 : vector<8x32xf32>
    %17 = math.exp %16 : vector<8x32xf32>
    %cst_6 = arith.constant dense<0.000000e+00> : vector<8xf32>
    %18 = vector.multi_reduction <add>, %17, %cst_6 [1] : vector<8x32xf32> to vector<8xf32>
    %19 = vector.shape_cast %18 : vector<8xf32> to vector<8x1xf32>
    %20 = math.log %19 : vector<8x1xf32>
    %21 = arith.addf %14, %20 : vector<8x1xf32>
    %22 = arith.subf %21, %12 : vector<8x1xf32>
    %cst_7 = arith.constant 0.000000e+00 : f32
    %23 = vector.broadcast %cst_7 : f32 to vector<8x1xf32>
    %24 = arith.subf %23, %22 : vector<8x1xf32>
    %25 = math.exp %24 : vector<8x1xf32>
    %cst_8 = arith.constant 1.000000e+00 : f32
    %26 = vector.broadcast %cst_8 : f32 to vector<8x1xf32>
    %27 = arith.subf %26, %25 : vector<8x1xf32>
    %cst_9 = arith.constant 0.000000e+00 : f32
    %28 = vector.broadcast %cst_9 : f32 to vector<8x1xf32>
    %29 = arith.maximumf %27, %28 : vector<8x1xf32>
    %30 = arith.mulf %29, %29 : vector<8x1xf32>
    %31 = arith.mulf %30, %22 : vector<8x1xf32>
    %c1_i32 = arith.constant 1 : i32
    %32 = arith.muli %arg0, %c1_i32 : i32
    %33 = arith.addi %32, %arg1 : i32
    %c0_i32_10 = arith.constant 0 : i32
    %34 = arith.cmpi slt, %33, %c0_i32_10 : i32
    %35 = arith.extui %34 : i1 to i32
    %c0_i32_11 = arith.constant 0 : i32
    %36 = arith.cmpi ne, %35, %c0_i32_11 : i32
    scf.if %36 {
      %c0_16 = arith.constant 0 : index
      %43 = memref.load %arg5[%c0_16] : memref<1xf32, #tpu.memory_space<smem>>
      %44 = vector.shape_cast %31 : vector<8x1xf32> to vector<1x8x1xf32>
      %cst_17 = arith.constant dense<0.000000e+00> : vector<1xf32>
      %45 = vector.multi_reduction <add>, %44, %cst_17 [1, 2] : vector<1x8x1xf32> to vector<1xf32>
      %46 = vector.shape_cast %45 : vector<1xf32> to vector<1x1x1xf32>
      %47 = vector.extract %46[0, 0, 0] : f32 from vector<1x1x1xf32>
      %48 = arith.addf %43, %47 : f32
      %c0_18 = arith.constant 0 : index
      %49 = memref.load %arg5[%c0_18] : memref<1xf32, #tpu.memory_space<smem>>
      memref.store %48, %arg5[%c0_18] : memref<1xf32, #tpu.memory_space<smem>>
    } else {
    }
    %c0_i32_12 = arith.constant 0 : i32
    %37 = arith.cmpi sge, %33, %c0_i32_12 : i32
    %38 = arith.extui %37 : i1 to i32
    %c0_i32_13 = arith.constant 0 : i32
    %39 = arith.cmpi ne, %38, %c0_i32_13 : i32
    scf.if %39 {
      %c8_i32 = arith.constant 8 : i32
      %43 = arith.muli %33, %c8_i32 : i32
      %44 = tpu.iota {dimensions = array<i32: 0>} : vector<8x1xi32>
      %45 = vector.broadcast %43 : i32 to vector<8x1xi32>
      %46 = arith.addi %45, %44 : vector<8x1xi32>
      %c8_i32_16 = arith.constant 8 : i32
      %47 = vector.broadcast %c8_i32_16 : i32 to vector<8x1xi32>
      %48 = arith.cmpi slt, %46, %47 : vector<8x1xi32>
      %c1_i32_17 = arith.constant 1 : i32
      %49 = arith.cmpi slt, %33, %c1_i32_17 : i32
      %50 = vector.broadcast %49 : i1 to vector<8x1xi1>
      %51 = arith.andi %48, %50 : vector<8x1xi1>
      %c0_18 = arith.constant 0 : index
      %52 = memref.load %arg5[%c0_18] : memref<1xf32, #tpu.memory_space<smem>>
      %cst_19 = arith.constant 0.000000e+00 : f32
      %53 = vector.broadcast %cst_19 : f32 to vector<8x1xf32>
      %54 = arith.select %51, %31, %53 : vector<8x1xi1>, vector<8x1xf32>
      %55 = vector.shape_cast %54 : vector<8x1xf32> to vector<1x8x1xf32>
      %cst_20 = arith.constant dense<0.000000e+00> : vector<1xf32>
      %56 = vector.multi_reduction <add>, %55, %cst_20 [1, 2] : vector<1x8x1xf32> to vector<1xf32>
      %57 = vector.shape_cast %56 : vector<1xf32> to vector<1x1x1xf32>
      %58 = vector.extract %57[0, 0, 0] : f32 from vector<1x1x1xf32>
      %59 = arith.addf %52, %58 : f32
      %c0_21 = arith.constant 0 : index
      %60 = memref.load %arg5[%c0_21] : memref<1xf32, #tpu.memory_space<smem>>
      memref.store %59, %arg5[%c0_21] : memref<1xf32, #tpu.memory_space<smem>>
    } else {
    }
    %c0_i32_14 = arith.constant 0 : i32
    %40 = arith.cmpi eq, %arg1, %c0_i32_14 : i32
    %41 = arith.extui %40 : i1 to i32
    %c0_i32_15 = arith.constant 0 : i32
    %42 = arith.cmpi ne, %41, %c0_i32_15 : i32
    scf.if %42 {
      %c0_16 = arith.constant 0 : index
      %43 = memref.load %arg5[%c0_16] : memref<1xf32, #tpu.memory_space<smem>>
      %44 = vector.broadcast %43 : f32 to vector<1x8x128xf32>
      %c0_17 = arith.constant 0 : index
      %c0_18 = arith.constant 0 : index
      %c0_19 = arith.constant 0 : index
      %45 = vector.load %arg4[%c0_17, %c0_18, %c0_19] : memref<1x8x128xf32, #tpu.memory_space<vmem>>, vector<1x8x128xf32>
      tpu.vector_store %arg4[%c0_17, %c0_18, %c0_19], %44 {strides = array<i32>} : memref<1x8x128xf32, #tpu.memory_space<vmem>>, vector<1x8x128xf32>,
    } else {
    }
    return
  }
  func.func @transform_0(%arg0: i32, %arg1: i32) -> (i32, i32) {
    %c1_i32 = arith.constant 1 : i32
    %0 = arith.muli %arg0, %c1_i32 : i32
    %1 = arith.addi %0, %arg1 : i32
    %c0_i32 = arith.constant 0 : i32
    %2 = arith.minsi %1, %c0_i32 : i32
    %c0_i32_0 = arith.constant 0 : i32
    %c0_i32_1 = arith.constant 0 : i32
    return %2, %c0_i32_0 : i32, i32
  }
  func.func @transform_1(%arg0: i32, %arg1: i32) -> (i32, i32) {
    %c1_i32 = arith.constant 1 : i32
    %0 = arith.muli %arg0, %c1_i32 : i32
    %1 = arith.addi %0, %arg1 : i32
    %c0_i32 = arith.constant 0 : i32
    %2 = arith.minsi %1, %c0_i32 : i32
    %c0_i32_0 = arith.constant 0 : i32
    %c0_i32_1 = arith.constant 0 : i32
    return %c0_i32_0, %2 : i32, i32
  }
  func.func @transform_2(%arg0: i32, %arg1: i32) -> (i32, i32, i32) {
    %c0_i32 = arith.constant 0 : i32
    %c0_i32_0 = arith.constant 0 : i32
    %c0_i32_1 = arith.constant 0 : i32
    return %arg0, %c0_i32, %c0_i32_0 : i32, i32, i32
  }
}

</mosaic_0001>

<llo_original>
// kernel: tpu_custom_call.1
$region0: #{tpu_custom_call.1}
  #allocation0 [shape = 'u32[]', space=smem, size = 0x4, offset = 0x4, fixed_abs, tag = 'smem constant byte address 0x4 - core index']
  #allocation1 [shape = 'u32[144,128]{1,0:T(1,128)}', space=vmem, size = 0x12000, scoped, tag = 'internal scratch']
  #allocation2 [shape = 'f32[1]{0:T(128)}', space=smem, size = 0x200, scoped, tag = 'scratch operand']
  %s0 = inlined_call_operand.hbm [shape: f32[8,32], index: 0, kind: input, shape index: {}]
  %s1 = inlined_call_operand.vmem [shape: s32[1,8], index: 1, kind: input, shape index: {}]
  %s2 = inlined_call_operand.hbm [shape: f32[1,8,128], index: 2, kind: output, shape index: {}]
  %s3 = sld [smem:[#allocation0]]
  $region38: #{tpu_custom_call.1} parent=0
    _
  %s5 = ssub.s32 1, %s3
  %s6 = scalar_select 0, %s5, %s3
  $region1: #{tpu_custom_call.1} parent=0
    #allocation3 [shape = 'u8[4096]{0}', space=vmem, size = 0x1000, scoped, tag = 'input window, operand 0, single buffered']
    #allocation4 [shape = 's32[1]{0}', space=sflag, size = 0x4, scoped, tag = 'scoped memory for tpu_custom_call.1']
    #allocation5 [shape = 's32[1]{0}', space=sflag, size = 0x4, scoped, tag = 'scoped memory for tpu_custom_call.1']
    #allocation6 [shape = 'u8[4096]{0}', space=vmem, size = 0x1000, scoped, tag = 'output window, operand 0, single buffered']
    %7 = vsyncpa [#allocation4], 0
    %8 = vsyncpa [#allocation5], 0
    // Predicated region
    $region2: #{tpu_custom_call.1} parent=1 // pred_check
      _
    $region3: #{tpu_custom_call.1} parent=1 // pred_check_branch
      %10 = sbr.rel (0) target = $region5
    $region4: #{tpu_custom_call.1} parent=1 // pred_region
      %s11 = sadd.s32 0, 0
      %p12 = scmp.lt.s32.totalorder %s11, 0
      %s13 = scalar_select %p12, %s11, 0
      %s15 = ssub.s32 128, 128
      %16 = vsyncadd [#allocation4], %s15
      %s17 = smul.addr %s13, 128
      %s18 = scalar_lea.hbm %s0, %s17
      %s20 = sshll.u32 [#allocation3], 4
      %s21 = int_to_ptr.vmem [resolvable:$true] %s20
      %23 = dma.hbm_to_vmem [thread:$0]  %s18, 128, %s21, [#allocation4]
    $region5: #{tpu_custom_call.1} parent=1 // pred_fallthru
      _
    // Predicated region
    $region6: #{tpu_custom_call.1} parent=1 // pred_check
      _
    $region7: #{tpu_custom_call.1} parent=1 // pred_check_branch
      %25 = sbr.rel (0) target = $region9
    $region8: #{tpu_custom_call.1} parent=1 // pred_region
      %s26 = sadd.s32 0, 0
      %p27 = scmp.lt.s32.totalorder %s26, 0
      %s28 = scalar_select %p27, %s26, 0
      %p29 = scmp.lt.s32.totalorder %s28, 0
      %s30 = scalar_select %p29, %s28, 0
      %s31 = scalar_lea.vmem %s1, %s30
      %s32 = sadd.s32 0, 0
      %p33 = scmp.lt.s32.totalorder %s32, 0
      %s34 = scalar_select %p33, %s32, 0
    $region9: #{tpu_custom_call.1} parent=1 // pred_fallthru
      _
    // Predicated region
    $region10: #{tpu_custom_call.1} parent=1 // pred_check
      _
    $region11: #{tpu_custom_call.1} parent=1 // pred_check_branch
      %36 = sbr.rel (0) target = $region13
    $region12: #{tpu_custom_call.1} parent=1 // pred_region
      %37 = dma.done [#allocation4], 128
    $region13: #{tpu_custom_call.1} parent=1 // pred_fallthru
      _
    %s38 = sadd.s32 0, 0
    %p39 = scmp.lt.s32.totalorder %s38, 0
    %s40 = scalar_select %p39, %s38, 0
    %p41 = scmp.lt.s32.totalorder %s40, 0
    %s42 = scalar_select %p41, %s40, 0
    %s43 = scalar_lea.vmem %s1, %s42
    %s44 = sadd.s32 0, 0
    %p45 = scmp.lt.s32.totalorder %s44, 0
    %s46 = scalar_select %p45, %s44, 0
    %s47 = sadd.s32 0, 0
    %p48 = scmp.lt.s32.totalorder %s47, 0
    %s49 = scalar_select %p48, %s47, 0
    %p50 = scmp.lt.s32.totalorder %s49, 0
    %s51 = scalar_select %p50, %s49, 0
    %s52 = scalar_lea.vmem %s1, %s51
    %s53 = sadd.s32 0, 0
    %p54 = scmp.lt.s32.totalorder %s53, 0
    %s55 = scalar_select %p54, %s53, 0
    %p56 = scmp.eq.s32.totalorder 0, 0
    // Predicated region
    $region14: #{tpu_custom_call.1} parent=1 // pred_check
      %p57 = pneg %p56
    $region15: #{tpu_custom_call.1} parent=1 // pred_check_branch
      %59 = sbr.rel (%p57) target = $region17
    $region16: #{tpu_custom_call.1} parent=1 // pred_region
      %s60 = scalar_lea.smem [#allocation2], 0
      %61 = sst [smem:[%s60]] 0.0
    $region17: #{tpu_custom_call.1} parent=1 // pred_fallthru
      _
    %v62 = vld [vmem:[%s52] sm:$0x1]
    %63 = vxpose.xlu0.b32.start [1/16] %v62, 128
    %64 = vxpose.xlu0.b32.cont [2/16] 0, 128
    %65 = vxpose.xlu0.b32.cont [3/16] 0, 128
    %66 = vxpose.xlu0.b32.cont [4/16] 0, 128
    %67 = vxpose.xlu0.b32.cont [5/16] 0, 128
    %68 = vxpose.xlu0.b32.cont [6/16] 0, 128
    %69 = vxpose.xlu0.b32.cont [7/16] 0, 128
    %70 = vxpose.xlu0.b32.cont [8/16] 0, 128
    %71 = vxpose.xlu0.b32.cont [9/16] 0, 128
    %72 = vxpose.xlu0.b32.cont [10/16] 0, 128
    %73 = vxpose.xlu0.b32.cont [11/16] 0, 128
    %74 = vxpose.xlu0.b32.cont [12/16] 0, 128
    %75 = vxpose.xlu0.b32.cont [13/16] 0, 128
    %76 = vxpose.xlu0.b32.cont [14/16] 0, 128
    %77 = vxpose.xlu0.b32.cont [15/16] 0, 128
    %78 = vxpose.xlu0.b32.end [16/16] 0, 128
    %v79 = vpop.trf.xlu0
    %v80 = vpop.trf.xlu0
    %v81 = vpop.trf.xlu0
    %v82 = vpop.trf.xlu0
    %v83 = vpop.trf.xlu0
    %v84 = vpop.trf.xlu0
    %v85 = vpop.trf.xlu0
    %v86 = vpop.trf.xlu0
    %v87 = vpop.trf.xlu0
    %v88 = vpop.trf.xlu0
    %v89 = vpop.trf.xlu0
    %v90 = vpop.trf.xlu0
    %v91 = vpop.trf.xlu0
    %v92 = vpop.trf.xlu0
    %v93 = vpop.trf.xlu0
    %v94 = vpop.trf.xlu0
    %v95 = vld [vmem:[#allocation3] sm:$0xff]
    %v96 = vlaneseq
    %v97 = vand.u32 %v96, 127
    %98 = vset.pattern.permute.xlu0 0
    %99 = vperm.xlu0 %98, %v79
    %v100 = vpop.permute.xlu0 %99
    %vm101 = vcmp.eq.s32.totalorder %v97, %v100
    %v102 = vsel %vm101, %v95, 0.0
    %vm103 = vcmask 261120
    %v104 = vsel %vm103, %v102, 0.0
    %105 = vadd.xlane.f32.xlu0 %v104
    %v106 = vpop.xlane.xlu0 %105
    %v107 = vsel %vm103, %v95, -inf
    %108 = vmax.xlane.f32.xlu0 %v107
    %v109 = vpop.xlane.xlu0 %108
    %v110 = vsub.f32 %v95, %v109
    %v111 = vmul.f32 %v110, 1.442695
    %v112 = vpow.pop %v111
    %v113 = vsel %vm103, %v112, 0.0
    %114 = vadd.xlane.f32.xlu0 %v113
    %v115 = vpop.xlane.xlu0 %114
    %v116 = vlog2.pop %v115
    %v117 = vmul.f32 %v116, 0.6931472
    %v118 = vadd.f32 %v109, %v117
    %v119 = vsub.f32 %v118, %v106
    %v120 = vsub.f32 0.0, %v119
    %v121 = vmul.f32 %v120, 1.442695
    %v122 = vpow.pop %v121
    %v123 = vsub.f32 1.0, %v122
    %v124 = vmax.f32 %v123, 0.0
    %v125 = vmul.f32 %v124, %v124
    %v126 = vmul.f32 %v125, %v119
    %s127 = sadd.s32 0, 0
    %p128 = scmp.lt.s32.totalorder %s127, 0
    // Predicated region
    $region18: #{tpu_custom_call.1} parent=1 // pred_check
      %p129 = pneg %p128
    $region19: #{tpu_custom_call.1} parent=1 // pred_check_branch
      %131 = sbr.rel (%p129) target = $region21
    $region20: #{tpu_custom_call.1} parent=1 // pred_region
      %s132 = sld [smem:[#allocation2]]
      %vm133 = vcmask 7168
      %v134 = vsel %vm133, %v126, 0.0
      %135 = vadd.xlane.f32.xlu0 %v134
      %v136 = vpop.xlane.xlu0 %135
      %v137 = vrot.slane %v136, 4
      %v138 = vadd.f32 %v136, %v137
      %v139 = vrot.slane %v138, 2
      %v140 = vadd.f32 %v138, %v139
      %v141 = vrot.slane %v140, 1
      %v142 = vadd.f32 %v140, %v141
      %s143 = vtos %v142
      %s144 = sadd.f32 %s132, %s143
      %s145 = scalar_lea.smem [#allocation2], 0
      %146 = sst [smem:[%s145]] %s144
    $region21: #{tpu_custom_call.1} parent=1 // pred_fallthru
      _
    %p147 = scmp.ge.s32.totalorder %s127, 0
    // Predicated region
    $region22: #{tpu_custom_call.1} parent=1 // pred_check
      %p148 = pneg %p147
    $region23: #{tpu_custom_call.1} parent=1 // pred_check_branch
      %150 = sbr.rel (%p148) target = $region25
    $region24: #{tpu_custom_call.1} parent=1 // pred_region
      %s151 = smul.u32 %s127, 8
      %v152 = vlaneseq
      %v153 = vshrl.u32 %v152, 7
      %v154 = vstv %s151
      %v155 = vadd.s32 %v154, %v153
      %vm156 = vcmp.lt.s32.totalorder %v155, 8
      %p157 = scmp.lt.s32.totalorder %s127, 1
      %s158 = scalar_select %p157, 1, 0
      %v159 = vstv %s158
      %vm160 = vcmp.eq.s32.totalorder %v159, 1
      %vm161 = vmand %vm156, %vm160
      %s162 = sld [smem:[#allocation2]]
      %v163 = vsel %vm161, %v126, 0.0
      %vm164 = vcmask 7168
      %v165 = vsel %vm164, %v163, 0.0
      %166 = vadd.xlane.f32.xlu0 %v165
      %v167 = vpop.xlane.xlu0 %166
      %v168 = vrot.slane %v167, 4
      %v169 = vadd.f32 %v167, %v168
      %v170 = vrot.slane %v169, 2
      %v171 = vadd.f32 %v169, %v170
      %v172 = vrot.slane %v171, 1
      %v173 = vadd.f32 %v171, %v172
      %s174 = vtos %v173
      %s175 = sadd.f32 %s162, %s174
      %s176 = scalar_lea.smem [#allocation2], 0
      %177 = sst [smem:[%s176]] %s175
    $region25: #{tpu_custom_call.1} parent=1 // pred_fallthru
      _
    // Predicated region
    $region26: #{tpu_custom_call.1} parent=1 // pred_check
      %p178 = pneg %p56
    $region27: #{tpu_custom_call.1} parent=1 // pred_check_branch
      %180 = sbr.rel (%p178) target = $region29
    $region28: #{tpu_custom_call.1} parent=1 // pred_region
      %s181 = sld [smem:[#allocation2]]
      %v182 = vstv %s181
      %183 = vst [vmem:[#allocation6] sm:$0xff] %v182
    $region29: #{tpu_custom_call.1} parent=1 // pred_fallthru
      _
    // Predicated region
    $region30: #{tpu_custom_call.1} parent=1 // pred_check
      _
    $region31: #{tpu_custom_call.1} parent=1 // pred_check_branch
      %185 = sbr.rel (0) target = $region33
    $region32: #{tpu_custom_call.1} parent=1 // pred_region
      %s187 = ssub.s32 128, 128
      %188 = vsyncadd [#allocation5], %s187
      %s190 = sshll.u32 [#allocation6], 4
      %s191 = int_to_ptr.vmem [resolvable:$true] %s190
      %193 = dma.vmem_to_hbm [thread:$0]  %s191, 128, %s2, [#allocation5]
    $region33: #{tpu_custom_call.1} parent=1 // pred_fallthru
      _
    // Predicated region
    $region34: #{tpu_custom_call.1} parent=1 // pred_check
      _
    $region35: #{tpu_custom_call.1} parent=1 // pred_check_branch
      %195 = sbr.rel (0) target = $region37
    $region36: #{tpu_custom_call.1} parent=1 // pred_region
      %196 = dma.done [#allocation5], 128
    $region37: #{tpu_custom_call.1} parent=1 // pred_fallthru
      _
    %197 = vsyncpa [#allocation4], 1
    %198 = vsyncpa [#allocation5], 1

</llo_original>
